<compile_context>
chip_gen: v7x
topology: tpu7x:2x2x1
jax: 0.10.0
libtpu: 0.0.40
codegen_flags: <defaults>
</compile_context>

<pallas_src>
import math

import numpy as np
import jax
import jax.numpy as jnp
from jax.experimental import pallas as pl
from jax.experimental.pallas import tpu as pltpu


# ---------------------------------------------------------------------------
# Generation-aware sizing helpers
# ---------------------------------------------------------------------------

def _round_up(x, m):
    return ((x + m - 1) // m) * m


def _generation_params():
    """Per-TPU-generation tiling targets (VMEM budget + roofline row tile)."""
    try:
        kind = jax.devices()[0].device_kind.lower()
    except Exception:
        kind = ""
    if ("v5 lite" in kind) or ("v5e" in kind) or ("v5lite" in kind):
        # 128 MiB VMEM; 197 TF/s vs ~0.82 TB/s -> cs >= ~256 is compute-bound.
        # Spend the spare VMEM on a larger ti (bigger weight DMAs, fewer k-steps).
        return dict(name="v5e", vmem_budget=100 << 20, vmem_cap=110 << 20,
                    cs_target=256, ti_target=2048, align=128, two_cores=False)
    if "v6" in kind:
        # 128 MiB VMEM; 918 TF/s vs ~1.4 TB/s -> need cs >= ~768 (use 1024).
        return dict(name="v6e", vmem_budget=100 << 20, vmem_cap=110 << 20,
                    cs_target=1024, ti_target=1024, align=256, two_cores=False)
    if ("v7" in kind) or ("7x" in kind):
        # 64 MiB VMEM/TC; 2 TCs each stream their own weight copy -> smaller
        # tiles, leave headroom under 64 MiB, guarantee >= 2 row tiles.
        return dict(name="v7x", vmem_budget=52 << 20, vmem_cap=58 << 20,
                    cs_target=640, ti_target=512, align=256, two_cores=True)
    # Unknown generation: conservative (v7x-like) sizing.
    return dict(name="unknown", vmem_budget=52 << 20, vmem_cap=58 << 20,
                cs_target=512, ti_target=512, align=256, two_cores=True)


def _best_divisor(rows, limit, mult):
    """Largest multiple of `mult` that divides `rows` and is <= limit, else None."""
    d = (limit // mult) * mult
    while d >= mult:
        if rows % d == 0:
            return d
        d -= mult
    return None


def _pick_row_tile(rows, cap, gen):
    cap = max(8, min(cap, rows))
    cs = (_best_divisor(rows, cap, gen["align"])
          or _best_divisor(rows, cap, 8)
          or rows)
    # v7x: make sure both TensorCores get row tiles when possible.
    if gen["two_cores"] and rows // cs < 2 and rows >= 16:
        half = (_best_divisor(rows, rows // 2, gen["align"])
                or _best_divisor(rows, rows // 2, 8))
        if half is not None:
            cs = half
    return cs


# ---------------------------------------------------------------------------
# One-time parameter preparation ("parameter-load time")
# ---------------------------------------------------------------------------

def prepare_llama_mlp_params(w_gate, w_up, w_down, *,
                             compute_dtype=jnp.bfloat16, inter_tile=None):
    """Cast, transpose and zero-pad the MLP weights ONCE.

    w_gate, w_up: (I, H) nn.Linear (out_features, in_features) layout, no bias
    w_down:       (H, I)

    Returns a dict with weights pre-transposed to the standard (K, N) matmul
    layout and the intermediate dim zero-padded to a multiple of the chosen
    inter tile `ti` (padding contributes exactly zero to the output).
    """
    inter, hidden = w_gate.shape
    assert w_up.shape == (inter, hidden)
    assert w_down.shape == (hidden, inter)

    gen = _generation_params()
    wb = np.dtype(compute_dtype).itemsize

    if inter_tile is None:
        # Largest ti (multiple of `align`) whose double-buffered gate/up/down
        # slices fit ~55% of the VMEM budget, capped at the generation target.
        ti_cap = int(0.55 * gen["vmem_budget"]) // (6 * hidden * wb)
        ti = max(gen["align"],
                 (min(gen["ti_target"], ti_cap) // gen["align"]) * gen["align"])
    else:
        assert inter_tile % 128 == 0, "inter_tile must be a multiple of 128"
        ti = inter_tile
    ti = min(ti, _round_up(inter, 128))       # don't tile past the (padded) I
    inter_pad = _round_up(inter, ti)
    pad = inter_pad - inter

    wg_t = jnp.transpose(w_gate).astype(compute_dtype)   # (H, I)
    wu_t = jnp.transpose(w_up).astype(compute_dtype)     # (H, I)
    wd_t = jnp.transpose(w_down).astype(compute_dtype)   # (I, H)
    if pad:
        wg_t = jnp.pad(wg_t, ((0, 0), (0, pad)))
        wu_t = jnp.pad(wu_t, ((0, 0), (0, pad)))
        wd_t = jnp.pad(wd_t, ((0, pad), (0, 0)))

    return dict(wg_t=wg_t, wu_t=wu_t, wd_t=wd_t,
                hidden=hidden, inter=inter, inter_pad=inter_pad, ti=ti,
                compute_dtype=compute_dtype)


# ---------------------------------------------------------------------------
# Kernel
# ---------------------------------------------------------------------------

def _mlp_chunk_kernel(x_ref, wg_ref, wu_ref, wd_ref, o_ref, acc_ref):
    # Grid: (row_tile r, inter_tile k); k is the reduction axis (last).
    # x_ref  : (CS, H)   rows of the flattened (B*S, H) input, ORIGINAL dtype
    # wg_ref : (H, TI)   gate_proj weight slice (pre-transposed, compute dtype)
    # wu_ref : (H, TI)   up_proj weight slice
    # wd_ref : (TI, H)   down_proj weight slice (pre-transposed)
    # o_ref  : (CS, H)   output rows (written once, at the last k step)
    # acc_ref: (CS, H)   f32 accumulator scratch
    k = pl.program_id(1)
    nk = pl.num_programs(1)

    # In-kernel cast of x to the compute dtype (no wrapper-side HBM cast pass).
    x = x_ref[...].astype(wg_ref.dtype)

    # Standard (M,K)@(K,N) contractions -> no NT-form relayout on the weights.
    gate = jnp.dot(x, wg_ref[...], preferred_element_type=jnp.float32)  # (CS,TI)
    up = jnp.dot(x, wu_ref[...], preferred_element_type=jnp.float32)    # (CS,TI)
    # SiLU * up in f32: sigmoid rides the EUP slot, multiplies the VPU, both
    # hidden under the MXU.
    hidden = (gate * jax.nn.sigmoid(gate) * up).astype(wd_ref.dtype)    # (CS,TI)
    partial = jnp.dot(hidden, wd_ref[...], preferred_element_type=jnp.float32)

    @pl.when(k == 0)
    def _init():
        acc_ref[...] = jnp.zeros_like(acc_ref)

    @pl.when(k < nk - 1)
    def _accumulate():
        acc_ref[...] += partial

    @pl.when(k == nk - 1)
    def _finalize():
        # Fuse the last partial into the store (no final acc write + re-read).
        o_ref[...] = (acc_ref[...] + partial).astype(o_ref.dtype)


# ---------------------------------------------------------------------------
# Forward wrapper (LinearWarpper semantics, world_size == 1)
# ---------------------------------------------------------------------------

def llama_mlp_warpper(x, params, *, mini_s=8, chunk_size=4096, chunk_mode=True,
                      row_tile=None):
    """Chunked LlamaMLP forward: down(silu(gate(x)) * up(x)).

    x:      (B, S, H), any float dtype (output has the same dtype)
    params: output of prepare_llama_mlp_params (pre-cast / pre-transposed /
            pre-padded weights)

    The torch module's sequence chunking (mini_s / chunk_size) is purely a
    memory optimization and does not change numerics; it is used here only as
    an upper bound on resident rows. The pre/post all_to_all of LinearWarpper
    is an identity for world_size == 1.
    """
    bsz, q_len, hidden = x.shape
    assert hidden == params["hidden"]

    gen = _generation_params()
    ti = params["ti"]
    inter_pad = params["inter_pad"]
    num_k = inter_pad // ti

    rows = bsz * q_len
    out_dtype = x.dtype
    xb = np.dtype(x.dtype).itemsize
    ob = np.dtype(out_dtype).itemsize
    wb = np.dtype(params["compute_dtype"]).itemsize

    if row_tile is None:
        # Upper bound from the module-level chunking (memory parity with torch).
        chunk_rows = chunk_size if chunk_mode else math.ceil(q_len / mini_s)
        cap_user = bsz * min(chunk_rows, q_len)
        # Upper bound from the VMEM budget left after the weight slices.
        w_bytes = 6 * ti * hidden * wb                      # double-buffered g/u/d
        budget_left = max(gen["vmem_budget"] - w_bytes, 8 << 20)
        cap_vmem = max(8, budget_left // (hidden * (2 * xb + 2 * ob + 4)))
        cs = _pick_row_tile(rows, min(gen["cs_target"], cap_user, cap_vmem), gen)
    else:
        cs = row_tile
    assert rows % cs == 0, "row count must be divisible by the row tile"
    num_row_tiles = rows // cs

    # Scoped-VMEM limit from the actual working set (generation-aware cap).
    est = (2 * cs * hidden * xb          # x tile (double-buffered, original dtype)
           + 2 * cs * hidden * ob        # out tile
           + 6 * ti * hidden * wb        # gate/up/down weight slices
           + cs * hidden * 4)            # f32 accumulator scratch
    vmem_limit = int(min(gen["vmem_cap"], max(int(est * 1.2), 32 << 20)))

    x2 = x.reshape(rows, hidden)         # no dtype cast here (done in-kernel)

    out = pl.pallas_call(
        _mlp_chunk_kernel,
        out_shape=jax.ShapeDtypeStruct((rows, hidden), out_dtype),
        grid_spec=pltpu.PrefetchScalarGridSpec(
            num_scalar_prefetch=0,
            grid=(num_row_tiles, num_k),
            in_specs=[
                pl.BlockSpec((cs, hidden), lambda r, k: (r, 0)),   # x rows
                pl.BlockSpec((hidden, ti), lambda r, k: (0, k)),   # gate W (H,TI)
                pl.BlockSpec((hidden, ti), lambda r, k: (0, k)),   # up W   (H,TI)
                pl.BlockSpec((ti, hidden), lambda r, k: (k, 0)),   # down W (TI,H)
            ],
            out_specs=pl.BlockSpec((cs, hidden), lambda r, k: (r, 0)),
            scratch_shapes=[pltpu.VMEM((cs, hidden), jnp.float32)],
        ),
        compiler_params=pltpu.CompilerParams(
            dimension_semantics=("parallel", "arbitrary"),
            vmem_limit_bytes=vmem_limit,
        ),
    )(x2, params["wg_t"], params["wu_t"], params["wd_t"])
    return out.reshape(bsz, q_len, hidden)


# ---------------------------------------------------------------------------
# Reference + self-test
# ---------------------------------------------------------------------------

def _reference(x, w_gate, w_up, w_down):
    gate = jnp.einsum("bsh,ih->bsi", x, w_gate, precision="highest")
    up = jnp.einsum("bsh,ih->bsi", x, w_up, precision="highest")
    hidden = gate * jax.nn.sigmoid(gate) * up
    return jnp.einsum("bsi,hi->bsh", hidden, w_down, precision="highest")


if __name__ == "__main__":
    # Small shapes consistent with the module: (bsz, q_len, hidden_size).
    # I = 192 is deliberately NOT a multiple of 128 to exercise the zero-padded
    # ragged intermediate-tile path.
    B, S, H, I = 2, 32, 128, 192
    key = jax.random.PRNGKey(0)
    kx, kg, ku, kd = jax.random.split(key, 4)

    x = jax.random.normal(kx, (B, S, H), dtype=jnp.float32)
    # Deterministic nn.Linear-style weights (out_features, in_features), no bias.
    w_gate = jax.random.normal(kg, (I, H), dtype=jnp.float32) * 0.02
    w_up = jax.random.normal(ku, (I, H), dtype=jnp.float32) * 0.02
    w_down = jax.random.normal(kd, (H, I), dtype=jnp.float32) * 0.02

    ref = _reference(x, w_gate, w_up, w_down)

    # f32 compute path with forced small tiles: mini_s=4 caps resident rows at
    # B*ceil(32/4)=16 -> 4 row tiles; inter_tile=128 -> 2 reduction steps with a
    # zero-padded ragged last tile. Tight structural check of tiling/accum/pad.
    p_f32 = prepare_llama_mlp_params(w_gate, w_up, w_down,
                                     compute_dtype=jnp.float32, inter_tile=128)
    out_f32 = llama_mlp_warpper(x, p_f32, mini_s=4, chunk_mode=False)
    out_f32 = jax.block_until_ready(out_f32)
    assert out_f32.shape == (B, S, H)
    assert jnp.allclose(out_f32, ref, atol=1e-3, rtol=1e-3)

    # Default path: bf16 MXU inputs with f32 accumulation, auto (cs, ti) from
    # the generation-aware VMEM / roofline selection.
    p_bf16 = prepare_llama_mlp_params(w_gate, w_up, w_down)
    out_bf16 = llama_mlp_warpper(x, p_bf16)
    out_bf16 = jax.block_until_ready(out_bf16)
    assert out_bf16.shape == (B, S, H)
    assert jnp.allclose(out_bf16, ref, atol=1e-2, rtol=2e-2)

    print("KERNEL_OK")
</pallas_src>

<mosaic_0001>
module attributes {stable_mosaic.version = 11 : i64} {
  func.func @_mlp_chunk_kernel(%arg0: i32, %arg1: i32, %arg2: memref<16x128xf32, #tpu.memory_space<vmem>>, %arg3: memref<128x128xf32, #tpu.memory_space<vmem>>, %arg4: memref<128x128xf32, #tpu.memory_space<vmem>>, %arg5: memref<128x128xf32, #tpu.memory_space<vmem>>, %arg6: memref<16x128xf32, #tpu.memory_space<vmem>>, %arg7: memref<16x128xf32, #tpu.memory_space<vmem>>) attributes {dimension_semantics = [#tpu.dimension_semantics<parallel>, #tpu.dimension_semantics<arbitrary>], iteration_bounds = array<i64: 4, 2>, scalar_prefetch = 0 : i64, scratch_operands = 1 : i64, tpu.core_type = #tpu.core_type<tc>, window_params = [{transform_indices = @transform_0, window_bounds = array<i64: 16, 128>}, {transform_indices = @transform_1, window_bounds = array<i64: 128, 128>}, {transform_indices = @transform_2, window_bounds = array<i64: 128, 128>}, {transform_indices = @transform_3, window_bounds = array<i64: 128, 128>}, {transform_indices = @transform_4, window_bounds = array<i64: 16, 128>}]} {
    %c0 = arith.constant 0 : index
    %c0_0 = arith.constant 0 : index
    %0 = vector.load %arg2[%c0, %c0_0] : memref<16x128xf32, #tpu.memory_space<vmem>>, vector<16x128xf32>
    %c0_1 = arith.constant 0 : index
    %c0_2 = arith.constant 0 : index
    %1 = vector.load %arg3[%c0_1, %c0_2] : memref<128x128xf32, #tpu.memory_space<vmem>>, vector<128x128xf32>
    %cst = arith.constant dense<0.000000e+00> : vector<16x128xf32>
    %2 = tpu.matmul %0, %1, %cst {dimension_numbers = #tpu.dot_dimension_numbers<[1], [0], [0], [1], [0, 0, 1, 1], [], []>} : vector<16x128xf32>, vector<128x128xf32>, vector<16x128xf32> -> vector<16x128xf32>
    %c0_3 = arith.constant 0 : index
    %c0_4 = arith.constant 0 : index
    %3 = vector.load %arg4[%c0_3, %c0_4] : memref<128x128xf32, #tpu.memory_space<vmem>>, vector<128x128xf32>
    %cst_5 = arith.constant dense<0.000000e+00> : vector<16x128xf32>
    %4 = tpu.matmul %0, %3, %cst_5 {dimension_numbers = #tpu.dot_dimension_numbers<[1], [0], [0], [1], [0, 0, 1, 1], [], []>} : vector<16x128xf32>, vector<128x128xf32>, vector<16x128xf32> -> vector<16x128xf32>
    %5 = arith.negf %2 : vector<16x128xf32>
    %6 = math.exp %5 : vector<16x128xf32>
    %cst_6 = arith.constant 1.000000e+00 : f32
    %7 = vector.broadcast %cst_6 : f32 to vector<16x128xf32>
    %8 = arith.addf %7, %6 : vector<16x128xf32>
    %9 = arith.divf %7, %8 : vector<16x128xf32>
    %10 = arith.mulf %2, %9 : vector<16x128xf32>
    %11 = arith.mulf %10, %4 : vector<16x128xf32>
    %c0_7 = arith.constant 0 : index
    %c0_8 = arith.constant 0 : index
    %12 = vector.load %arg5[%c0_7, %c0_8] : memref<128x128xf32, #tpu.memory_space<vmem>>, vector<128x128xf32>
    %cst_9 = arith.constant dense<0.000000e+00> : vector<16x128xf32>
    %13 = tpu.matmul %11, %12, %cst_9 {dimension_numbers = #tpu.dot_dimension_numbers<[1], [0], [0], [1], [0, 0, 1, 1], [], []>} : vector<16x128xf32>, vector<128x128xf32>, vector<16x128xf32> -> vector<16x128xf32>
    %c0_i32 = arith.constant 0 : i32
    %14 = arith.cmpi eq, %arg1, %c0_i32 : i32
    %15 = arith.extui %14 : i1 to i32
    %c0_i32_10 = arith.constant 0 : i32
    %16 = arith.cmpi ne, %15, %c0_i32_10 : i32
    scf.if %16 {
      %cst_14 = arith.constant 0.000000e+00 : f32
      %23 = vector.broadcast %cst_14 : f32 to vector<16x128xf32>
      %c0_15 = arith.constant 0 : index
      %c0_16 = arith.constant 0 : index
      %24 = vector.load %arg7[%c0_15, %c0_16] : memref<16x128xf32, #tpu.memory_space<vmem>>, vector<16x128xf32>
      tpu.vector_store %arg7[%c0_15, %c0_16], %23 {strides = array<i32>} : memref<16x128xf32, #tpu.memory_space<vmem>>, vector<16x128xf32>,
    } else {
    }
    %c1_i32 = arith.constant 1 : i32
    %17 = arith.cmpi slt, %arg1, %c1_i32 : i32
    %18 = arith.extui %17 : i1 to i32
    %c0_i32_11 = arith.constant 0 : i32
    %19 = arith.cmpi ne, %18, %c0_i32_11 : i32
    scf.if %19 {
      %c0_14 = arith.constant 0 : index
      %c0_15 = arith.constant 0 : index
      %23 = vector.load %arg7[%c0_14, %c0_15] : memref<16x128xf32, #tpu.memory_space<vmem>>, vector<16x128xf32>
      %24 = arith.addf %23, %13 : vector<16x128xf32>
      %c0_16 = arith.constant 0 : index
      %c0_17 = arith.constant 0 : index
      %25 = vector.load %arg7[%c0_16, %c0_17] : memref<16x128xf32, #tpu.memory_space<vmem>>, vector<16x128xf32>
      tpu.vector_store %arg7[%c0_16, %c0_17], %24 {strides = array<i32>} : memref<16x128xf32, #tpu.memory_space<vmem>>, vector<16x128xf32>,
    } else {
    }
    %c1_i32_12 = arith.constant 1 : i32
    %20 = arith.cmpi eq, %arg1, %c1_i32_12 : i32
    %21 = arith.extui %20 : i1 to i32
    %c0_i32_13 = arith.constant 0 : i32
    %22 = arith.cmpi ne, %21, %c0_i32_13 : i32
    scf.if %22 {
      %c0_14 = arith.constant 0 : index
      %c0_15 = arith.constant 0 : index
      %23 = vector.load %arg7[%c0_14, %c0_15] : memref<16x128xf32, #tpu.memory_space<vmem>>, vector<16x128xf32>
      %24 = arith.addf %23, %13 : vector<16x128xf32>
      %c0_16 = arith.constant 0 : index
      %c0_17 = arith.constant 0 : index
      %25 = vector.load %arg6[%c0_16, %c0_17] : memref<16x128xf32, #tpu.memory_space<vmem>>, vector<16x128xf32>
      tpu.vector_store %arg6[%c0_16, %c0_17], %24 {strides = array<i32>} : memref<16x128xf32, #tpu.memory_space<vmem>>, vector<16x128xf32>,
    } else {
    }
    return
  }
  func.func @transform_0(%arg0: i32, %arg1: i32) -> (i32, i32) {
    %c0_i32 = arith.constant 0 : i32
    %c0_i32_0 = arith.constant 0 : i32
    return %arg0, %c0_i32 : i32, i32
  }
  func.func @transform_1(%arg0: i32, %arg1: i32) -> (i32, i32) {
    %c0_i32 = arith.constant 0 : i32
    %c0_i32_0 = arith.constant 0 : i32
    return %c0_i32, %arg1 : i32, i32
  }
  func.func @transform_2(%arg0: i32, %arg1: i32) -> (i32, i32) {
    %c0_i32 = arith.constant 0 : i32
    %c0_i32_0 = arith.constant 0 : i32
    return %c0_i32, %arg1 : i32, i32
  }
  func.func @transform_3(%arg0: i32, %arg1: i32) -> (i32, i32) {
    %c0_i32 = arith.constant 0 : i32
    %c0_i32_0 = arith.constant 0 : i32
    return %arg1, %c0_i32 : i32, i32
  }
  func.func @transform_4(%arg0: i32, %arg1: i32) -> (i32, i32) {
    %c0_i32 = arith.constant 0 : i32
    %c0_i32_0 = arith.constant 0 : i32
    return %arg0, %c0_i32 : i32, i32
  }
}

</mosaic_0001>

<llo_original>
// kernel: tpu_custom_call.1
$region0: #{tpu_custom_call.1}
  #allocation0 [shape = 'u32[]', space=smem, size = 0x4, offset = 0x4, fixed_abs, tag = 'smem constant byte address 0x4 - core index']
  #allocation1 [shape = 'u32[144,128]{1,0:T(1,128)}', space=vmem, size = 0x12000, scoped, tag = 'internal scratch']
  #allocation2 [shape = 'f32[16,128]{1,0:T(8,128)}', space=vmem, size = 0x2000, scoped, tag = 'scratch operand']
  %s0 = inlined_call_operand.hbm [shape: f32[64,128], index: 0, kind: input, shape index: {}]
  %s1 = inlined_call_operand.hbm [shape: f32[128,256], index: 1, kind: input, shape index: {}]
  %s2 = inlined_call_operand.hbm [shape: f32[128,256], index: 2, kind: input, shape index: {}]
  %s3 = inlined_call_operand.hbm [shape: f32[256,128], index: 3, kind: input, shape index: {}]
  %s4 = inlined_call_operand.hbm [shape: f32[64,128], index: 4, kind: output, shape index: {}]
  %s5 = sld [smem:[#allocation0]]
  $region77: #{tpu_custom_call.1} parent=0
    _
  %s7 = ssub.s32 1, %s5
  %s8 = scalar_select 0, %s7, %s5
  $region1: #{tpu_custom_call.1} parent=0
    #allocation3 [shape = 'u8[16384]{0}', space=vmem, size = 0x4000, scoped, tag = 'input window, operand 0']
    #allocation4 [shape = 's32[2]{0}', space=sflag, size = 0x8, scoped, tag = 'scoped memory for tpu_custom_call.1']
    #allocation5 [shape = 's32[2]{0}', space=sflag, size = 0x8, scoped, tag = 'scoped memory for tpu_custom_call.1']
    #allocation6 [shape = 'u8[131072]{0}', space=vmem, size = 0x20000, scoped, tag = 'input window, operand 1']
    #allocation7 [shape = 's32[2]{0}', space=sflag, size = 0x8, scoped, tag = 'scoped memory for tpu_custom_call.1']
    #allocation8 [shape = 'u8[131072]{0}', space=vmem, size = 0x20000, scoped, tag = 'input window, operand 2']
    #allocation9 [shape = 'u8[131072]{0}', space=vmem, size = 0x20000, scoped, tag = 'input window, operand 3']
    #allocation10 [shape = 's32[2]{0}', space=sflag, size = 0x8, scoped, tag = 'scoped memory for tpu_custom_call.1']
    #allocation11 [shape = 'u8[16384]{0}', space=vmem, size = 0x4000, scoped, tag = 'output window, operand 0']
    %9 = vsyncpa [#allocation4], 0
    %s10 = scalar_lea.sflag [#allocation4], 1
    %11 = vsyncpa %s10, 0
    %12 = vsyncpa [#allocation7], 0
    %s13 = scalar_lea.sflag [#allocation7], 1
    %14 = vsyncpa %s13, 0
    %15 = vsyncpa [#allocation10], 0
    %s16 = scalar_lea.sflag [#allocation10], 1
    %17 = vsyncpa %s16, 0
    %18 = vsyncpa [#allocation5], 0
    %s19 = scalar_lea.sflag [#allocation5], 1
    %20 = vsyncpa %s19, 0
    loop: start=0, step=1, limit=10
    $region2: #{tpu_custom_call.1} parent=1 // loop_pre_header
      _
    $region3: #{tpu_custom_call.1} parent=1 // loop_header
      %s22 = sphi 0, %s26
      %p23 = scmp.ge.s32.totalorder %s22, 10
      %s29 = sphi 0, %s41
      %s30 = sphi 0, %s37
      %s31 = sphi 0, %s29
      %s32 = sphi 0, %s30
      %s33 = sphi 0, %s31
      %s34 = sphi 0, %s32
      %s44 = sphi 0, %s46
      %s47 = sphi 0, %s44
      %s48 = sphi 0, %s47
      %s64 = sphi 0, %s48
      %s70 = sphi 0, %s72
      %s73 = sphi 0, %s70
      %s74 = sphi 0, %s73
      %s90 = sphi 0, %s74
      %s96 = sphi 0, %s98
      %s99 = sphi 0, %s96
      %s100 = sphi 0, %s99
      %s116 = sphi 0, %s100
      %s122 = sphi 0, %s124
      %s125 = sphi 0, %s122
      %s126 = sphi 0, %s125
      %s142 = sphi 0, %s126
      %s148 = sphi 0, %s150
      %s151 = sphi 0, %s148
      %s152 = sphi 0, %s151
      %s168 = sphi 0, %s152
    $region4: #{tpu_custom_call.1} parent=1 // loop_header_branch
      %25 = sbr.rel (%p23) target = $region8
    $region5: #{tpu_custom_call.1} parent=1 // loop_body
      %s27 = ssub.s32 %s22, 1
      %s28 = ssub.s32 %s22, 2
      %s35 = sadd.s32 1, %s30
      %p36 = scmp.ge.s32.totalorder %s35, 2
      %s37 = scalar_select %p36, 0, %s35
      %s38 = sadd.s32 1, %s29
      %s39 = scalar_select %p36, %s38, %s29
      %p40 = scmp.ge.s32.totalorder %s39, 4
      %s41 = scalar_select %p40, 0, %s39
      %s42 = ssub.s32 %s29, %s41
      %p43 = scmp.eq.s32.totalorder %s42, 0
      %s45 = sadd.s32 %s44, 1
      %s46 = scalar_select %p43, %s44, %s45
      %p49 = pneg %p43
      %p50 = scmp.eq.s32.totalorder %s22, 7
      %p51 = por %p49, %p50
      %p52 = scmp.ne.s32.totalorder %s44, %s47
      %p53 = scmp.eq.s32.totalorder %s22, 0
      %p54 = por %p52, %p53
      %p55 = scmp.ne.s32.totalorder %s44, %s47
      %p56 = scmp.eq.s32.totalorder %s27, 7
      %p57 = por %p55, %p56
      %p58 = scmp.ne.s32.totalorder %s47, %s48
      %p59 = scmp.eq.s32.totalorder %s27, 0
      %p60 = por %p58, %p59
      %p61 = scmp.ne.s32.totalorder %s47, %s48
      %p62 = scmp.eq.s32.totalorder %s28, 7
      %p63 = por %p61, %p62
      %p65 = scmp.ne.s32.totalorder %s48, %s64
      %p66 = scmp.eq.s32.totalorder %s28, 0
      %p67 = por %p65, %p66
      %s68 = ssub.s32 %s30, %s37
      %p69 = scmp.eq.s32.totalorder %s68, 0
      %s71 = sadd.s32 %s70, 1
      %s72 = scalar_select %p69, %s70, %s71
      %p75 = pneg %p69
      %p76 = scmp.eq.s32.totalorder %s22, 7
      %p77 = por %p75, %p76
      %p78 = scmp.ne.s32.totalorder %s70, %s73
      %p79 = scmp.eq.s32.totalorder %s22, 0
      %p80 = por %p78, %p79
      %p81 = scmp.ne.s32.totalorder %s70, %s73
      %p82 = scmp.eq.s32.totalorder %s27, 7
      %p83 = por %p81, %p82
      %p84 = scmp.ne.s32.totalorder %s73, %s74
      %p85 = scmp.eq.s32.totalorder %s27, 0
      %p86 = por %p84, %p85
      %p87 = scmp.ne.s32.totalorder %s73, %s74
      %p88 = scmp.eq.s32.totalorder %s28, 7
      %p89 = por %p87, %p88
      %p91 = scmp.ne.s32.totalorder %s74, %s90
      %p92 = scmp.eq.s32.totalorder %s28, 0
      %p93 = por %p91, %p92
      %s94 = ssub.s32 %s30, %s37
      %p95 = scmp.eq.s32.totalorder %s94, 0
      %s97 = sadd.s32 %s96, 1
      %s98 = scalar_select %p95, %s96, %s97
      %p101 = pneg %p95
      %p102 = scmp.eq.s32.totalorder %s22, 7
      %p103 = por %p101, %p102
      %p104 = scmp.ne.s32.totalorder %s96, %s99
      %p105 = scmp.eq.s32.totalorder %s22, 0
      %p106 = por %p104, %p105
      %p107 = scmp.ne.s32.totalorder %s96, %s99
      %p108 = scmp.eq.s32.totalorder %s27, 7
      %p109 = por %p107, %p108
      %p110 = scmp.ne.s32.totalorder %s99, %s100
      %p111 = scmp.eq.s32.totalorder %s27, 0
      %p112 = por %p110, %p111
      %p113 = scmp.ne.s32.totalorder %s99, %s100
      %p114 = scmp.eq.s32.totalorder %s28, 7
      %p115 = por %p113, %p114
      %p117 = scmp.ne.s32.totalorder %s100, %s116
      %p118 = scmp.eq.s32.totalorder %s28, 0
      %p119 = por %p117, %p118
      %s120 = ssub.s32 %s30, %s37
      %p121 = scmp.eq.s32.totalorder %s120, 0
      %s123 = sadd.s32 %s122, 1
      %s124 = scalar_select %p121, %s122, %s123
      %p127 = pneg %p121
      %p128 = scmp.eq.s32.totalorder %s22, 7
      %p129 = por %p127, %p128
      %p130 = scmp.ne.s32.totalorder %s122, %s125
      %p131 = scmp.eq.s32.totalorder %s22, 0
      %p132 = por %p130, %p131
      %p133 = scmp.ne.s32.totalorder %s122, %s125
      %p134 = scmp.eq.s32.totalorder %s27, 7
      %p135 = por %p133, %p134
      %p136 = scmp.ne.s32.totalorder %s125, %s126
      %p137 = scmp.eq.s32.totalorder %s27, 0
      %p138 = por %p136, %p137
      %p139 = scmp.ne.s32.totalorder %s125, %s126
      %p140 = scmp.eq.s32.totalorder %s28, 7
      %p141 = por %p139, %p140
      %p143 = scmp.ne.s32.totalorder %s126, %s142
      %p144 = scmp.eq.s32.totalorder %s28, 0
      %p145 = por %p143, %p144
      %s146 = ssub.s32 %s29, %s41
      %p147 = scmp.eq.s32.totalorder %s146, 0
      %s149 = sadd.s32 %s148, 1
      %s150 = scalar_select %p147, %s148, %s149
      %p153 = pneg %p147
      %p154 = scmp.eq.s32.totalorder %s22, 7
      %p155 = por %p153, %p154
      %p156 = scmp.ne.s32.totalorder %s148, %s151
      %p157 = scmp.eq.s32.totalorder %s22, 0
      %p158 = por %p156, %p157
      %p159 = scmp.ne.s32.totalorder %s148, %s151
      %p160 = scmp.eq.s32.totalorder %s27, 7
      %p161 = por %p159, %p160
      %p162 = scmp.ne.s32.totalorder %s151, %s152
      %p163 = scmp.eq.s32.totalorder %s27, 0
      %p164 = por %p162, %p163
      %p165 = scmp.ne.s32.totalorder %s151, %s152
      %p166 = scmp.eq.s32.totalorder %s28, 7
      %p167 = por %p165, %p166
      %p169 = scmp.ne.s32.totalorder %s152, %s168
      %p170 = scmp.eq.s32.totalorder %s28, 0
      %p171 = por %p169, %p170
      %p172 = scmp.le.s32.totalorder 1, %s22
      %p173 = scmp.lt.s32.totalorder %s22, 9
      %p174 = pnand %p172, %p173
      %p175 = pneg %p174
      // Predicated region
      $region9: #{tpu_custom_call.1} parent=5 // pred_check
        _
      $region10: #{tpu_custom_call.1} parent=5 // pred_check_branch
        %177 = sbr.rel (%p174) target = $region12
      $region11: #{tpu_custom_call.1} parent=5 // pred_region
        %s178 = ssub.s32 %s22, 1
      $region12: #{tpu_custom_call.1} parent=5 // pred_fallthru
        _
      %p179 = scmp.lt.s32.totalorder %s22, 8
      // Predicated region
      $region13: #{tpu_custom_call.1} parent=5 // pred_check
        %p180 = pneg %p179
      $region14: #{tpu_custom_call.1} parent=5 // pred_check_branch
        %182 = sbr.rel (%p180) target = $region16
      $region15: #{tpu_custom_call.1} parent=5 // pred_region
        // Predicated region
        $region17: #{tpu_custom_call.1} parent=15 // pred_check
          %p183 = pneg %p54
        $region18: #{tpu_custom_call.1} parent=15 // pred_check_branch
          %185 = sbr.rel (%p183) target = $region20
        $region19: #{tpu_custom_call.1} parent=15 // pred_region
          %s186 = sand.u32 %s44, 1
          %s187 = scalar_lea.sflag [#allocation4], %s186
          %s188 = sand.u32 %s44, 1
          %s189 = smul.addr %s188, 16
          %s190 = scalar_lea.vmem [#allocation3], %s189
          %s191 = smul.u32 2, %s29
          %s193 = ssub.s32 256, 256
          %194 = vsyncadd %s187, %s193
          %s195 = smul.addr %s191, 128
          %s196 = scalar_lea.hbm %s0, %s195
          %s197 = sshll.u32 %s190, 4
          %s198 = int_to_ptr.vmem [resolvable:$true] %s197
          %203 = dma.hbm_to_vmem [thread:$0]  %s196, 256, %s198, %s187, 128, 128, 8
        $region20: #{tpu_custom_call.1} parent=15 // pred_fallthru
          _
        // Predicated region
        $region21: #{tpu_custom_call.1} parent=15 // pred_check
          %p204 = pneg %p80
        $region22: #{tpu_custom_call.1} parent=15 // pred_check_branch
          %206 = sbr.rel (%p204) target = $region24
        $region23: #{tpu_custom_call.1} parent=15 // pred_region
          %s207 = sand.u32 %s22, 1
          %s208 = scalar_lea.sflag [#allocation7], %s207
          %s209 = sand.u32 %s70, 1
          %s210 = smul.addr %s209, 128
          %s211 = scalar_lea.vmem [#allocation6], %s210
          %s213 = ssub.s32 2048, 2048
          %214 = vsyncadd %s208, %s213
          %s215 = smul.addr %s30, 128
          %s216 = scalar_lea.hbm %s1, %s215
          %s217 = sshll.u32 %s211, 4
          %s218 = int_to_ptr.vmem [resolvable:$true] %s217
          %223 = dma.hbm_to_vmem [thread:$0]  %s216, 2048, %s218, %s208, 256, 128, 8
        $region24: #{tpu_custom_call.1} parent=15 // pred_fallthru
          _
        // Predicated region
        $region25: #{tpu_custom_call.1} parent=15 // pred_check
          %p224 = pneg %p106
        $region26: #{tpu_custom_call.1} parent=15 // pred_check_branch
          %226 = sbr.rel (%p224) target = $region28
        $region27: #{tpu_custom_call.1} parent=15 // pred_region
          %s227 = sand.u32 %s22, 1
          %s228 = scalar_lea.sflag [#allocation7], %s227
          %s229 = sand.u32 %s96, 1
          %s230 = smul.addr %s229, 128
          %s231 = scalar_lea.vmem [#allocation8], %s230
          %s233 = ssub.s32 2048, 2048
          %234 = vsyncadd %s228, %s233
          %s235 = smul.addr %s30, 128
          %s236 = scalar_lea.hbm %s2, %s235
          %s237 = sshll.u32 %s231, 4
          %s238 = int_to_ptr.vmem [resolvable:$true] %s237
          %243 = dma.hbm_to_vmem [thread:$0]  %s236, 2048, %s238, %s228, 256, 128, 8
        $region28: #{tpu_custom_call.1} parent=15 // pred_fallthru
          _
        // Predicated region
        $region29: #{tpu_custom_call.1} parent=15 // pred_check
          %p244 = pneg %p132
        $region30: #{tpu_custom_call.1} parent=15 // pred_check_branch
          %246 = sbr.rel (%p244) target = $region32
        $region31: #{tpu_custom_call.1} parent=15 // pred_region
          %s247 = sand.u32 %s122, 1
          %s248 = scalar_lea.sflag [#allocation10], %s247
          %s249 = sand.u32 %s122, 1
          %s250 = smul.addr %s249, 128
          %s251 = scalar_lea.vmem [#allocation9], %s250
          %s252 = smul.u32 16, %s30
          %s254 = ssub.s32 2048, 2048
          %255 = vsyncadd %s248, %s254
          %s256 = smul.addr %s252, 128
          %s257 = scalar_lea.hbm %s3, %s256
          %s258 = sshll.u32 %s251, 4
          %s259 = int_to_ptr.vmem [resolvable:$true] %s258
          %264 = dma.hbm_to_vmem [thread:$0]  %s257, 2048, %s259, %s248, 128, 128, 8
        $region32: #{tpu_custom_call.1} parent=15 // pred_fallthru
          _
      $region16: #{tpu_custom_call.1} parent=5 // pred_fallthru
        _
      %p265 = scmp.le.s32.totalorder 1, %s22
      %p266 = scmp.lt.s32.totalorder %s22, 9
      %p267 = pnand %p265, %p266
      %p268 = pneg %p267
      // Predicated region
      $region33: #{tpu_custom_call.1} parent=5 // pred_check
        _
      $region34: #{tpu_custom_call.1} parent=5 // pred_check_branch
        %270 = sbr.rel (%p267) target = $region36
      $region35: #{tpu_custom_call.1} parent=5 // pred_region
        %s271 = ssub.s32 %s22, 1
        %s272 = sand.u32 %s47, 1
        %s273 = scalar_lea.sflag [#allocation4], %s272
        %s274 = sand.u32 %s47, 1
        %s275 = smul.addr %s274, 16
        %s276 = scalar_lea.vmem [#allocation3], %s275
        // Predicated region
        $region37: #{tpu_custom_call.1} parent=35 // pred_check
          %p277 = pneg %p60
        $region38: #{tpu_custom_call.1} parent=35 // pred_check_branch
          %279 = sbr.rel (%p277) target = $region40
        $region39: #{tpu_custom_call.1} parent=35 // pred_region
          %280 = dma.done %s273, 256
        $region40: #{tpu_custom_call.1} parent=35 // pred_fallthru
          _
        %s281 = sand.u32 %s27, 1
        %s282 = scalar_lea.sflag [#allocation7], %s281
        %s283 = sand.u32 %s73, 1
        %s284 = smul.addr %s283, 128
        %s285 = scalar_lea.vmem [#allocation6], %s284
        // Predicated region
        $region41: #{tpu_custom_call.1} parent=35 // pred_check
          %p286 = pneg %p86
        $region42: #{tpu_custom_call.1} parent=35 // pred_check_branch
          %288 = sbr.rel (%p286) target = $region44
        $region43: #{tpu_custom_call.1} parent=35 // pred_region
          %289 = dma.done %s282, 2048
        $region44: #{tpu_custom_call.1} parent=35 // pred_fallthru
          _
        %s290 = sand.u32 %s27, 1
        %s291 = scalar_lea.sflag [#allocation7], %s290
        %s292 = sand.u32 %s99, 1
        %s293 = smul.addr %s292, 128
        %s294 = scalar_lea.vmem [#allocation8], %s293
        // Predicated region
        $region45: #{tpu_custom_call.1} parent=35 // pred_check
          %p295 = pneg %p112
        $region46: #{tpu_custom_call.1} parent=35 // pred_check_branch
          %297 = sbr.rel (%p295) target = $region48
        $region47: #{tpu_custom_call.1} parent=35 // pred_region
          %298 = dma.done %s291, 2048
        $region48: #{tpu_custom_call.1} parent=35 // pred_fallthru
          _
        %s299 = sand.u32 %s125, 1
        %s300 = scalar_lea.sflag [#allocation10], %s299
        %s301 = sand.u32 %s125, 1
        %s302 = smul.addr %s301, 128
        %s303 = scalar_lea.vmem [#allocation9], %s302
        // Predicated region
        $region49: #{tpu_custom_call.1} parent=35 // pred_check
          %p304 = pneg %p138
        $region50: #{tpu_custom_call.1} parent=35 // pred_check_branch
          %306 = sbr.rel (%p304) target = $region52
        $region51: #{tpu_custom_call.1} parent=35 // pred_region
          %307 = dma.done %s300, 2048
        $region52: #{tpu_custom_call.1} parent=35 // pred_fallthru
          _
        %s308 = sand.u32 %s47, 1
        %s309 = scalar_lea.sflag [#allocation4], %s308
        %s310 = sand.u32 %s47, 1
        %s311 = smul.addr %s310, 16
        %s312 = scalar_lea.vmem [#allocation3], %s311
        %p313 = pneg %p60
        %p314 = pneg %p57
        %s315 = sand.u32 %s27, 1
        %s316 = scalar_lea.sflag [#allocation7], %s315
        %s317 = sand.u32 %s73, 1
        %s318 = smul.addr %s317, 128
        %s319 = scalar_lea.vmem [#allocation6], %s318
        %p320 = pneg %p86
        %p321 = pneg %p83
        %s322 = sand.u32 %s27, 1
        %s323 = scalar_lea.sflag [#allocation7], %s322
        %s324 = sand.u32 %s99, 1
        %s325 = smul.addr %s324, 128
        %s326 = scalar_lea.vmem [#allocation8], %s325
        %p327 = pneg %p112
        %p328 = pneg %p109
        %s329 = sand.u32 %s125, 1
        %s330 = scalar_lea.sflag [#allocation10], %s329
        %s331 = sand.u32 %s125, 1
        %s332 = smul.addr %s331, 128
        %s333 = scalar_lea.vmem [#allocation9], %s332
        %p334 = pneg %p138
        %p335 = pneg %p135
        %p336 = pneg %p164
        %p337 = pneg %p161
        %s338 = sand.u32 %s151, 1
        %s339 = scalar_lea.sflag [#allocation5], %s338
        %s340 = sand.u32 %s151, 1
        %s341 = smul.addr %s340, 16
        %s342 = scalar_lea.vmem [#allocation11], %s341
        %s343 = smul.u32 2, %s31
        %s344 = smul.u32 16, %s32
        %s345 = smul.u32 2, %s31
        %v346 = vld [vmem:[%s276] sm:$0xff]
        %v347 = vld [vmem:[%s276 + $0x8] sm:$0xff]
        %v348 = vld [vmem:[%s285] sm:$0xff]
        %v349 = vld [vmem:[%s285 + $0x8] sm:$0xff]
        %v350 = vld [vmem:[%s285 + $0x10] sm:$0xff]
        %v351 = vld [vmem:[%s285 + $0x18] sm:$0xff]
        %v352 = vld [vmem:[%s285 + $0x20] sm:$0xff]
        %v353 = vld [vmem:[%s285 + $0x28] sm:$0xff]
        %v354 = vld [vmem:[%s285 + $0x30] sm:$0xff]
        %v355 = vld [vmem:[%s285 + $0x38] sm:$0xff]
        %v356 = vld [vmem:[%s285 + $0x40] sm:$0xff]
        %v357 = vld [vmem:[%s285 + $0x48] sm:$0xff]
        %v358 = vld [vmem:[%s285 + $0x50] sm:$0xff]
        %v359 = vld [vmem:[%s285 + $0x58] sm:$0xff]
        %v360 = vld [vmem:[%s285 + $0x60] sm:$0xff]
        %v361 = vld [vmem:[%s285 + $0x68] sm:$0xff]
        %v362 = vld [vmem:[%s285 + $0x70] sm:$0xff]
        %v363 = vld [vmem:[%s285 + $0x78] sm:$0xff]
        %364 = vmatprep.subr.mxu0 0.0
        %365 = vmatpush1.msra.mxu0 %v348
        %366 = vmatprep.subr.mxu0 0.0
        %367 = vmatpush1.msra.mxu0 %v349
        %368 = vmatprep.subr.mxu0 0.0
        %369 = vmatpush1.msra.mxu0 %v350
        %370 = vmatprep.subr.mxu0 0.0
        %371 = vmatpush1.msra.mxu0 %v351
        %372 = vmatprep.subr.mxu0 0.0
        %373 = vmatpush1.msra.mxu0 %v352
        %374 = vmatprep.subr.mxu0 0.0
        %375 = vmatpush1.msra.mxu0 %v353
        %376 = vmatprep.subr.mxu0 0.0
        %377 = vmatpush1.msra.mxu0 %v354
        %378 = vmatprep.subr.mxu0 0.0
        %379 = vmatpush1.msra.mxu0 %v355
        %380 = vmatprep.subr.mxu0 0.0
        %381 = vmatpush1.msra.mxu0 %v356
        %382 = vmatprep.subr.mxu0 0.0
        %383 = vmatpush1.msra.mxu0 %v357
        %384 = vmatprep.subr.mxu0 0.0
        %385 = vmatpush1.msra.mxu0 %v358
        %386 = vmatprep.subr.mxu0 0.0
        %387 = vmatpush1.msra.mxu0 %v359
        %388 = vmatprep.subr.mxu0 0.0
        %389 = vmatpush1.msra.mxu0 %v360
        %390 = vmatprep.subr.mxu0 0.0
        %391 = vmatpush1.msra.mxu0 %v361
        %392 = vmatprep.subr.mxu0 0.0
        %393 = vmatpush1.msra.mxu0 %v362
        %394 = vmatprep.subr.mxu0 0.0
        %395 = vmatpush1.msra.mxu0 %v363
        %396 = vmatprep.subr.mxu0 0.0
        %397 = vmatpush1.msra.mxu0 0.0
        %398 = vmatprep.subr.mxu0 0.0
        %399 = vmatpush1.msra.mxu0 0.0
        %400 = vmatprep.subr.mxu0 0.0
        %401 = vmatpush1.msra.mxu0 0.0
        %402 = vmatprep.subr.mxu0 0.0
        %403 = vmatpush1.msra.mxu0 0.0
        %404 = vmatprep.subr.mxu0 0.0
        %405 = vmatpush1.msra.mxu0 0.0
        %406 = vmatprep.subr.mxu0 0.0
        %407 = vmatpush1.msra.mxu0 0.0
        %408 = vmatprep.subr.mxu0 0.0
        %409 = vmatpush1.msra.mxu0 0.0
        %410 = vmatprep.subr.mxu0 0.0
        %411 = vmatpush1.msra.mxu0 0.0
        %412 = vmatprep.subr.mxu0 0.0
        %413 = vmatpush1.msra.mxu0 0.0
        %414 = vmatprep.subr.mxu0 0.0
        %415 = vmatpush1.msra.mxu0 0.0
        %416 = vmatprep.subr.mxu0 0.0
        %417 = vmatpush1.msra.mxu0 0.0
        %418 = vmatprep.subr.mxu0 0.0
        %419 = vmatpush1.msra.mxu0 0.0
        %420 = vmatprep.subr.mxu0 0.0
        %421 = vmatpush1.msra.mxu0 0.0
        %422 = vmatprep.subr.mxu0 0.0
        %423 = vmatpush1.msra.mxu0 0.0
        %424 = vmatprep.subr.mxu0 0.0
        %425 = vmatpush1.msra.mxu0 0.0
        %426 = vmatprep.subr.mxu0 0.0
        %427 = vmatpush1.msra.mxu0 0.0
        %428 = vmatprep.mubr.f32.mxu0 0.0
        %429 = vmatmul.mubr.f32.gmra.mrb[0].mxu0 %v346
        %v430 = vpop.f32.mrb[0].mxu0
        %v431 = vadd.f32 0.0, %v430
        %v432 = vpop.f32.mrb[0].mxu0
        %433 = vmatprep.mubr.f32.mxu0 0.0
        %434 = vmatmul.mubr.f32.gmra.mrb[0].mxu0 %v347
        %v435 = vpop.f32.mrb[0].mxu0
        %v436 = vadd.f32 0.0, %v435
        %v437 = vpop.f32.mrb[0].mxu0
        %438 = vdwg.mxu0
        %v439 = vld [vmem:[%s294] sm:$0xff]
        %v440 = vld [vmem:[%s294 + $0x8] sm:$0xff]
        %v441 = vld [vmem:[%s294 + $0x10] sm:$0xff]
        %v442 = vld [vmem:[%s294 + $0x18] sm:$0xff]
        %v443 = vld [vmem:[%s294 + $0x20] sm:$0xff]
        %v444 = vld [vmem:[%s294 + $0x28] sm:$0xff]
        %v445 = vld [vmem:[%s294 + $0x30] sm:$0xff]
        %v446 = vld [vmem:[%s294 + $0x38] sm:$0xff]
        %v447 = vld [vmem:[%s294 + $0x40] sm:$0xff]
        %v448 = vld [vmem:[%s294 + $0x48] sm:$0xff]
        %v449 = vld [vmem:[%s294 + $0x50] sm:$0xff]
        %v450 = vld [vmem:[%s294 + $0x58] sm:$0xff]
        %v451 = vld [vmem:[%s294 + $0x60] sm:$0xff]
        %v452 = vld [vmem:[%s294 + $0x68] sm:$0xff]
        %v453 = vld [vmem:[%s294 + $0x70] sm:$0xff]
        %v454 = vld [vmem:[%s294 + $0x78] sm:$0xff]
        %455 = vmatprep.subr.mxu0 0.0
        %456 = vmatpush1.msra.mxu0 %v439
        %457 = vmatprep.subr.mxu0 0.0
        %458 = vmatpush1.msra.mxu0 %v440
        %459 = vmatprep.subr.mxu0 0.0
        %460 = vmatpush1.msra.mxu0 %v441
        %461 = vmatprep.subr.mxu0 0.0
        %462 = vmatpush1.msra.mxu0 %v442
        %463 = vmatprep.subr.mxu0 0.0
        %464 = vmatpush1.msra.mxu0 %v443
        %465 = vmatprep.subr.mxu0 0.0
        %466 = vmatpush1.msra.mxu0 %v444
        %467 = vmatprep.subr.mxu0 0.0
        %468 = vmatpush1.msra.mxu0 %v445
        %469 = vmatprep.subr.mxu0 0.0
        %470 = vmatpush1.msra.mxu0 %v446
        %471 = vmatprep.subr.mxu0 0.0
        %472 = vmatpush1.msra.mxu0 %v447
        %473 = vmatprep.subr.mxu0 0.0
        %474 = vmatpush1.msra.mxu0 %v448
        %475 = vmatprep.subr.mxu0 0.0
        %476 = vmatpush1.msra.mxu0 %v449
        %477 = vmatprep.subr.mxu0 0.0
        %478 = vmatpush1.msra.mxu0 %v450
        %479 = vmatprep.subr.mxu0 0.0
        %480 = vmatpush1.msra.mxu0 %v451
        %481 = vmatprep.subr.mxu0 0.0
        %482 = vmatpush1.msra.mxu0 %v452
        %483 = vmatprep.subr.mxu0 0.0
        %484 = vmatpush1.msra.mxu0 %v453
        %485 = vmatprep.subr.mxu0 0.0
        %486 = vmatpush1.msra.mxu0 %v454
        %487 = vmatprep.subr.mxu0 0.0
        %488 = vmatpush1.msra.mxu0 0.0
        %489 = vmatprep.subr.mxu0 0.0
        %490 = vmatpush1.msra.mxu0 0.0
        %491 = vmatprep.subr.mxu0 0.0
        %492 = vmatpush1.msra.mxu0 0.0
        %493 = vmatprep.subr.mxu0 0.0
        %494 = vmatpush1.msra.mxu0 0.0
        %495 = vmatprep.subr.mxu0 0.0
        %496 = vmatpush1.msra.mxu0 0.0
        %497 = vmatprep.subr.mxu0 0.0
        %498 = vmatpush1.msra.mxu0 0.0
        %499 = vmatprep.subr.mxu0 0.0
        %500 = vmatpush1.msra.mxu0 0.0
        %501 = vmatprep.subr.mxu0 0.0
        %502 = vmatpush1.msra.mxu0 0.0
        %503 = vmatprep.subr.mxu0 0.0
        %504 = vmatpush1.msra.mxu0 0.0
        %505 = vmatprep.subr.mxu0 0.0
        %506 = vmatpush1.msra.mxu0 0.0
        %507 = vmatprep.subr.mxu0 0.0
        %508 = vmatpush1.msra.mxu0 0.0
        %509 = vmatprep.subr.mxu0 0.0
        %510 = vmatpush1.msra.mxu0 0.0
        %511 = vmatprep.subr.mxu0 0.0
        %512 = vmatpush1.msra.mxu0 0.0
        %513 = vmatprep.subr.mxu0 0.0
        %514 = vmatpush1.msra.mxu0 0.0
        %515 = vmatprep.subr.mxu0 0.0
        %516 = vmatpush1.msra.mxu0 0.0
        %517 = vmatprep.subr.mxu0 0.0
        %518 = vmatpush1.msra.mxu0 0.0
        %519 = vmatprep.mubr.f32.mxu0 0.0
        %520 = vmatmul.mubr.f32.gmra.mrb[0].mxu0 %v346
        %v521 = vpop.f32.mrb[0].mxu0
        %v522 = vadd.f32 0.0, %v521
        %v523 = vpop.f32.mrb[0].mxu0
        %524 = vmatprep.mubr.f32.mxu0 0.0
        %525 = vmatmul.mubr.f32.gmra.mrb[0].mxu0 %v347
        %v526 = vpop.f32.mrb[0].mxu0
        %v527 = vadd.f32 0.0, %v526
        %v528 = vpop.f32.mrb[0].mxu0
        %529 = vdwg.mxu0
        %v530 = vxor.u32 %v431, 2147483648
        %v531 = vxor.u32 %v436, 2147483648
        %v532 = vmul.f32 %v530, 1.442695
        %v533 = vpow.pop %v532
        %v534 = vmul.f32 %v531, 1.442695
        %v535 = vpow.pop %v534
        %v536 = vadd.f32 %v533, 1.0
        %v537 = vadd.f32 %v535, 1.0
        %v538 = vrcp.pop %v536
        %v539 = vmul.f32 1.0, %v538
        %v540 = vrcp.pop %v537
        %v541 = vmul.f32 1.0, %v540
        %v542 = vmul.f32 %v431, %v539
        %v543 = vmul.f32 %v436, %v541
        %v544 = vmul.f32 %v542, %v522
        %v545 = vmul.f32 %v543, %v527
        %v546 = vld [vmem:[%s303] sm:$0xff]
        %v547 = vld [vmem:[%s303 + $0x8] sm:$0xff]
        %v548 = vld [vmem:[%s303 + $0x10] sm:$0xff]
        %v549 = vld [vmem:[%s303 + $0x18] sm:$0xff]
        %v550 = vld [vmem:[%s303 + $0x20] sm:$0xff]
        %v551 = vld [vmem:[%s303 + $0x28] sm:$0xff]
        %v552 = vld [vmem:[%s303 + $0x30] sm:$0xff]
        %v553 = vld [vmem:[%s303 + $0x38] sm:$0xff]
        %v554 = vld [vmem:[%s303 + $0x40] sm:$0xff]
        %v555 = vld [vmem:[%s303 + $0x48] sm:$0xff]
        %v556 = vld [vmem:[%s303 + $0x50] sm:$0xff]
        %v557 = vld [vmem:[%s303 + $0x58] sm:$0xff]
        %v558 = vld [vmem:[%s303 + $0x60] sm:$0xff]
        %v559 = vld [vmem:[%s303 + $0x68] sm:$0xff]
        %v560 = vld [vmem:[%s303 + $0x70] sm:$0xff]
        %v561 = vld [vmem:[%s303 + $0x78] sm:$0xff]
        %562 = vmatprep.subr.mxu0 0.0
        %563 = vmatpush1.msra.mxu0 %v546
        %564 = vmatprep.subr.mxu0 0.0
        %565 = vmatpush1.msra.mxu0 %v547
        %566 = vmatprep.subr.mxu0 0.0
        %567 = vmatpush1.msra.mxu0 %v548
        %568 = vmatprep.subr.mxu0 0.0
        %569 = vmatpush1.msra.mxu0 %v549
        %570 = vmatprep.subr.mxu0 0.0
        %571 = vmatpush1.msra.mxu0 %v550
        %572 = vmatprep.subr.mxu0 0.0
        %573 = vmatpush1.msra.mxu0 %v551
        %574 = vmatprep.subr.mxu0 0.0
        %575 = vmatpush1.msra.mxu0 %v552
        %576 = vmatprep.subr.mxu0 0.0
        %577 = vmatpush1.msra.mxu0 %v553
        %578 = vmatprep.subr.mxu0 0.0
        %579 = vmatpush1.msra.mxu0 %v554
        %580 = vmatprep.subr.mxu0 0.0
        %581 = vmatpush1.msra.mxu0 %v555
        %582 = vmatprep.subr.mxu0 0.0
        %583 = vmatpush1.msra.mxu0 %v556
        %584 = vmatprep.subr.mxu0 0.0
        %585 = vmatpush1.msra.mxu0 %v557
        %586 = vmatprep.subr.mxu0 0.0
        %587 = vmatpush1.msra.mxu0 %v558
        %588 = vmatprep.subr.mxu0 0.0
        %589 = vmatpush1.msra.mxu0 %v559
        %590 = vmatprep.subr.mxu0 0.0
        %591 = vmatpush1.msra.mxu0 %v560
        %592 = vmatprep.subr.mxu0 0.0
        %593 = vmatpush1.msra.mxu0 %v561
        %594 = vmatprep.subr.mxu0 0.0
        %595 = vmatpush1.msra.mxu0 0.0
        %596 = vmatprep.subr.mxu0 0.0
        %597 = vmatpush1.msra.mxu0 0.0
        %598 = vmatprep.subr.mxu0 0.0
        %599 = vmatpush1.msra.mxu0 0.0
        %600 = vmatprep.subr.mxu0 0.0
        %601 = vmatpush1.msra.mxu0 0.0
        %602 = vmatprep.subr.mxu0 0.0
        %603 = vmatpush1.msra.mxu0 0.0
        %604 = vmatprep.subr.mxu0 0.0
        %605 = vmatpush1.msra.mxu0 0.0
        %606 = vmatprep.subr.mxu0 0.0
        %607 = vmatpush1.msra.mxu0 0.0
        %608 = vmatprep.subr.mxu0 0.0
        %609 = vmatpush1.msra.mxu0 0.0
        %610 = vmatprep.subr.mxu0 0.0
        %611 = vmatpush1.msra.mxu0 0.0
        %612 = vmatprep.subr.mxu0 0.0
        %613 = vmatpush1.msra.mxu0 0.0
        %614 = vmatprep.subr.mxu0 0.0
        %615 = vmatpush1.msra.mxu0 0.0
        %616 = vmatprep.subr.mxu0 0.0
        %617 = vmatpush1.msra.mxu0 0.0
        %618 = vmatprep.subr.mxu0 0.0
        %619 = vmatpush1.msra.mxu0 0.0
        %620 = vmatprep.subr.mxu0 0.0
        %621 = vmatpush1.msra.mxu0 0.0
        %622 = vmatprep.subr.mxu0 0.0
        %623 = vmatpush1.msra.mxu0 0.0
        %624 = vmatprep.subr.mxu0 0.0
        %625 = vmatpush1.msra.mxu0 0.0
        %626 = vmatprep.mubr.f32.mxu0 0.0
        %627 = vmatmul.mubr.f32.gmra.mrb[0].mxu0 %v544
        %v628 = vpop.f32.mrb[0].mxu0
        %v629 = vadd.f32 0.0, %v628
        %v630 = vpop.f32.mrb[0].mxu0
        %631 = vmatprep.mubr.f32.mxu0 0.0
        %632 = vmatmul.mubr.f32.gmra.mrb[0].mxu0 %v545
        %v633 = vpop.f32.mrb[0].mxu0
        %v634 = vadd.f32 0.0, %v633
        %v635 = vpop.f32.mrb[0].mxu0
        %636 = vdwg.mxu0
        %p637 = scmp.eq.s32.totalorder %s32, 0
        // Predicated region
        $region53: #{tpu_custom_call.1} parent=35 // pred_check
          %p638 = pneg %p637
        $region54: #{tpu_custom_call.1} parent=35 // pred_check_branch
          %640 = sbr.rel (%p638) target = $region56
        $region55: #{tpu_custom_call.1} parent=35 // pred_region
          %641 = vst [vmem:[#allocation2] sm:$0xff] 0.0
          %642 = vst [vmem:[#allocation2 + $0x8] sm:$0xff] 0.0
        $region56: #{tpu_custom_call.1} parent=35 // pred_fallthru
          _
        %p643 = scmp.lt.s32.totalorder %s32, 1
        // Predicated region
        $region57: #{tpu_custom_call.1} parent=35 // pred_check
          %p644 = pneg %p643
        $region58: #{tpu_custom_call.1} parent=35 // pred_check_branch
          %646 = sbr.rel (%p644) target = $region60
        $region59: #{tpu_custom_call.1} parent=35 // pred_region
          %v647 = vld [vmem:[#allocation2] sm:$0xff]
          %v648 = vld [vmem:[#allocation2 + $0x8] sm:$0xff]
          %v649 = vadd.f32 %v647, %v629
          %v650 = vadd.f32 %v648, %v634
          %651 = vst [vmem:[#allocation2] sm:$0xff] %v649
          %652 = vst [vmem:[#allocation2 + $0x8] sm:$0xff] %v650
        $region60: #{tpu_custom_call.1} parent=35 // pred_fallthru
          _
        %p653 = scmp.eq.s32.totalorder %s32, 1
        // Predicated region
        $region61: #{tpu_custom_call.1} parent=35 // pred_check
          %p654 = pneg %p653
        $region62: #{tpu_custom_call.1} parent=35 // pred_check_branch
          %656 = sbr.rel (%p654) target = $region64
        $region63: #{tpu_custom_call.1} parent=35 // pred_region
          %v657 = vld [vmem:[#allocation2] sm:$0xff]
          %v658 = vld [vmem:[#allocation2 + $0x8] sm:$0xff]
          %v659 = vadd.f32 %v657, %v629
          %v660 = vadd.f32 %v658, %v634
          %661 = vst [vmem:[%s342] sm:$0xff] %v659
          %662 = vst [vmem:[%s342 + $0x8] sm:$0xff] %v660
        $region64: #{tpu_custom_call.1} parent=35 // pred_fallthru
          _
        %s663 = sand.u32 %s151, 1
        %s664 = scalar_lea.sflag [#allocation5], %s663
        %s665 = sand.u32 %s151, 1
        %s666 = smul.addr %s665, 16
        %s667 = scalar_lea.vmem [#allocation11], %s666
        // Predicated region
        $region65: #{tpu_custom_call.1} parent=35 // pred_check
          %p668 = pneg %p161
        $region66: #{tpu_custom_call.1} parent=35 // pred_check_branch
          %670 = sbr.rel (%p668) target = $region68
        $region67: #{tpu_custom_call.1} parent=35 // pred_region
          %s671 = smul.u32 2, %s31
          %s673 = ssub.s32 256, 256
          %674 = vsyncadd %s664, %s673
          %s675 = smul.addr %s671, 128
          %s676 = scalar_lea.hbm %s4, %s675
          %s677 = sshll.u32 %s667, 4
          %s678 = int_to_ptr.vmem [resolvable:$true] %s677
          %683 = dma.vmem_to_hbm [thread:$0]  %s678, 256, %s676, %s664, 128, 128, 8
        $region68: #{tpu_custom_call.1} parent=35 // pred_fallthru
          _
      $region36: #{tpu_custom_call.1} parent=5 // pred_fallthru
        _
      %p684 = scmp.le.s32.totalorder 2, %s22
      // Predicated region
      $region69: #{tpu_custom_call.1} parent=5 // pred_check
        %p685 = pneg %p684
      $region70: #{tpu_custom_call.1} parent=5 // pred_check_branch
        %687 = sbr.rel (%p685) target = $region72
      $region71: #{tpu_custom_call.1} parent=5 // pred_region
        %s688 = ssub.s32 %s22, 2
        // Predicated region
        $region73: #{tpu_custom_call.1} parent=71 // pred_check
          %p689 = pneg %p167
        $region74: #{tpu_custom_call.1} parent=71 // pred_check_branch
          %691 = sbr.rel (%p689) target = $region76
        $region75: #{tpu_custom_call.1} parent=71 // pred_region
          %s692 = sand.u32 %s152, 1
          %s693 = scalar_lea.sflag [#allocation5], %s692
          %s694 = sand.u32 %s152, 1
          %s695 = smul.addr %s694, 16
          %s696 = scalar_lea.vmem [#allocation11], %s695
          %697 = dma.done %s693, 256
        $region76: #{tpu_custom_call.1} parent=71 // pred_fallthru
          _
      $region72: #{tpu_custom_call.1} parent=5 // pred_fallthru
        _
    $region6: #{tpu_custom_call.1} parent=1 // loop_footer
      %s26 = sadd.s32 1, %s22
    $region7: #{tpu_custom_call.1} parent=1 // loop_footer_branch
      %21 = sbr.rel target = $region3
    $region8: #{tpu_custom_call.1} parent=1 // loop_exit
      _
    %698 = vsyncpa [#allocation4], 1
    %s699 = scalar_lea.sflag [#allocation4], 1
    %700 = vsyncpa %s699, 1
    %701 = vsyncpa [#allocation7], 1
    %s702 = scalar_lea.sflag [#allocation7], 1
    %703 = vsyncpa %s702, 1
    %704 = vsyncpa [#allocation10], 1
    %s705 = scalar_lea.sflag [#allocation10], 1
    %706 = vsyncpa %s705, 1
    %707 = vsyncpa [#allocation5], 1
    %s708 = scalar_lea.sflag [#allocation5], 1
    %709 = vsyncpa %s708, 1

</llo_original>
